<compile_context>
chip_gen: v7x
topology: tpu7x:2x2x1
jax: 0.10.0
libtpu: 0.0.40
codegen_flags: <defaults>
</compile_context>

<pallas_src>
import functools

import jax
import jax.numpy as jnp
from jax.experimental import pallas as pl
from jax.experimental.pallas import tpu as pltpu


def _round_up(n, m):
    return ((n + m - 1) // m) * m


def _apply_activation(h, activation):
    if activation == "ReLU":
        return jnp.maximum(h, 0.0)
    if activation == "Tanh":
        return jnp.tanh(h)
    if activation == "ELU":
        return jnp.where(h > 0.0, h, jnp.expm1(h))  # alpha = 1, expm1 for precision
    if activation == "None":
        return h
    raise ValueError(f"unknown activation {activation}")


def _rvtdnn_kernel(*refs, num_layers, activation, compute_dtype):
    # refs = (x_ref, w0, b0, w1, b1, ..., w_{L-1}, b_{L-1}, out_ref)
    # x_ref  : (d_in,  batch_tile)   feature-major; batch on the lane axis
    # w_ref l: (out_l, in_l)         native PyTorch weight layout (compute dtype)
    # b_ref l: (out_l, 1)            always f32
    # out_ref: (d_out, batch_tile)
    x_ref = refs[0]
    out_ref = refs[-1]
    param_refs = refs[1:-1]

    h = x_ref[...]  # already in compute dtype (wrapper casts x once)
    for l in range(num_layers):
        w_ref = param_refs[2 * l]
        b_ref = param_refs[2 * l + 1]
        # (out, in) @ (in, bt) -> (out, bt): MXU N-dim = batch_tile (full lanes).
        acc = jnp.dot(w_ref[...], h, preferred_element_type=jnp.float32)
        acc = acc + b_ref[...]  # f32 bias broadcast over lanes
        if l != num_layers - 1:  # no activation after the last Linear
            if compute_dtype is not None:
                # Keep every subsequent matmul on the bf16 MXU path and run the
                # activation in the low-precision dtype (EUP bf16 on v6e/v7x).
                acc = acc.astype(compute_dtype)
            h = _apply_activation(acc, activation)
        else:
            h = acc
    out_ref[...] = h.astype(out_ref.dtype)


def rvtdnn_forward_cn(x_cn, params, activation="ReLU", *, batch_tile=8192,
                      compute_dtype=None):
    """Feature-major fast path.

    x_cn:   (layer_dims[0], B) float32  -- batch on the last (lane) axis.
    params: list of (W, b) with W: (out_dim, in_dim), b: (out_dim, 1), f32.
    Returns (layer_dims[-1], B) in x_cn.dtype.
    """
    d_in, B = x_cn.shape
    num_layers = len(params)
    d_out = params[-1][0].shape[0]

    # Lane-aligned batch tile: multiple of 128, no larger than the 128-padded
    # batch; default 8192 (sweep 8192..32768 for big batches).
    b128 = _round_up(B, 128)
    bt = max(128, min(_round_up(batch_tile, 128), b128))
    # Ensure >=2 grid steps when the batch allows so both v7x TensorCores get
    # work on the "parallel" grid axis.
    if b128 >= 256 and (b128 // bt) < 2:
        bt = _round_up(-(-b128 // 2), 128)
    b_pad = _round_up(B, bt)

    # Batch padding + single cast of x: wrapper-side layout plumbing only and
    # skipped entirely when the batch already matches.
    x_t = x_cn
    if b_pad != B:
        x_t = jnp.pad(x_t, ((0, 0), (0, b_pad - B)))
    if compute_dtype is not None and x_t.dtype != compute_dtype:
        x_t = x_t.astype(compute_dtype)

    kernel = functools.partial(
        _rvtdnn_kernel,
        num_layers=num_layers,
        activation=activation,
        compute_dtype=compute_dtype,
    )

    # x block: full feature dim on sublanes, batch tile on lanes.
    in_specs = [pl.BlockSpec((d_in, bt), lambda i: (0, i))]
    flat_params = []
    for w, b in params:
        wk = w.astype(compute_dtype) if compute_dtype is not None else w
        # Constant block index -> parameters stay resident in VMEM across steps.
        in_specs.append(pl.BlockSpec(wk.shape, lambda i: (0, 0)))
        in_specs.append(pl.BlockSpec(b.shape, lambda i: (0, 0)))  # bias stays f32
        flat_params.extend([wk, b])

    out_specs = pl.BlockSpec((d_out, bt), lambda i: (0, i))

    # Working-set estimate so large tiles don't trip the default scoped-VMEM
    # limit (16 MiB on v5e); cap at v7x's 64 MiB physical VMEM.
    c_bytes = jnp.dtype(compute_dtype).itemsize if compute_dtype is not None else 4
    max_dim = max([d_in] + [w.shape[0] for w, _ in params])
    est = (2 * d_in * bt * c_bytes                       # x, double-buffered
           + 2 * d_out * bt * 4                          # out, double-buffered
           + 3 * max_dim * bt * 4                        # live layer temporaries
           + 2 * sum(w.size * c_bytes + b.size * 4 for w, b in params))
    vmem_limit = int(min(max(2 * est, 32 << 20), 64 << 20))

    out_t = pl.pallas_call(
        kernel,
        out_shape=jax.ShapeDtypeStruct((d_out, b_pad), x_cn.dtype),
        grid_spec=pl.GridSpec(
            grid=(b_pad // bt,),
            in_specs=in_specs,
            out_specs=out_specs,
        ),
        compiler_params=pltpu.CompilerParams(
            dimension_semantics=("parallel",),
            vmem_limit_bytes=vmem_limit,
        ),
    )(x_t, *flat_params)

    if b_pad != B:
        out_t = out_t[:, :B]
    return out_t


def rvtdnn_forward(x, params, activation="ReLU", *, batch_tile=8192,
                   compute_dtype=None):
    """PyTorch-layout entry point: x is (B, layer_dims[0]), returns (B, d_out).

    Prefer `rvtdnn_forward_cn` if the surrounding pipeline can stay
    feature-major; the transposes here are extra HBM passes.
    """
    out_cn = rvtdnn_forward_cn(
        x.T, params, activation,
        batch_tile=batch_tile, compute_dtype=compute_dtype,
    )
    return out_cn.T


def init_rvtdnn_params(layer_dims, key):
    """Deterministic init matching the nn.Linear shapes of RVTDNN.

    PyTorch nn.Linear(in, out) has weight (out, in), bias (out,).
    We keep weight as (out, in) and store bias as (out, 1).
    """
    params = []
    for in_dim, out_dim in zip(layer_dims[:-1], layer_dims[1:]):
        key, kw, kb = jax.random.split(key, 3)
        bound = 1.0 / jnp.sqrt(jnp.float32(in_dim))  # PyTorch default uniform bound
        w = jax.random.uniform(
            kw, (out_dim, in_dim), jnp.float32, minval=-bound, maxval=bound
        )
        b = jax.random.uniform(
            kb, (out_dim, 1), jnp.float32, minval=-bound, maxval=bound
        )
        params.append((w, b))
    return params


def rvtdnn_reference(x, params, activation="ReLU", compute_dtype=None):
    """Pure-JAX reference mirroring the kernel's numerics (for verification)."""
    if compute_dtype is not None:
        h = x.astype(compute_dtype)
    else:
        h = x.astype(jnp.float32)
    n = len(params)
    for l, (w, b) in enumerate(params):
        wk = w.astype(compute_dtype) if compute_dtype is not None else w
        acc = jnp.dot(h, wk.T, preferred_element_type=jnp.float32) + b.T
        if l != n - 1:
            if compute_dtype is not None:
                acc = acc.astype(compute_dtype)
            h = _apply_activation(acc, activation)
        else:
            h = acc
    return h.astype(x.dtype)


if __name__ == "__main__":
    # Small shapes consistent with the module, e.g. layer_dims = [6, 32, 32, 2]
    layer_dims = [6, 32, 32, 2]

    key = jax.random.PRNGKey(0)
    key_x1, key_x2, key_p = jax.random.split(key, 3)
    params = init_rvtdnn_params(layer_dims, key_p)

    # batch=16 exercises the single-tile path; batch=300 exercises padding and
    # a 2-step "parallel" grid (both TensorCores on v7x).
    test_batches = {16: key_x1, 300: key_x2}

    for batch, kx in test_batches.items():
        x = jax.random.normal(kx, (batch, layer_dims[0]), jnp.float32)
        for activation in ("ReLU", "Tanh", "ELU", "None"):
            # f32 path: bit-tight vs the f32 reference.
            out = rvtdnn_forward(x, params, activation=activation)
            out = jax.block_until_ready(out)
            ref = rvtdnn_reference(x, params, activation=activation)
            assert out.shape == (batch, layer_dims[-1])
            assert jnp.allclose(out, ref, atol=1e-5, rtol=1e-5), (
                f"f32 mismatch vs reference (batch={batch}, act={activation})"
            )

            # bf16 compute path: every matmul runs with bf16 inputs / f32
            # accumulate; compare against the matching bf16 reference.
            out_bf = rvtdnn_forward(
                x, params, activation=activation, compute_dtype=jnp.bfloat16
            )
            out_bf = jax.block_until_ready(out_bf)
            ref_bf = rvtdnn_reference(
                x, params, activation=activation, compute_dtype=jnp.bfloat16
            )
            assert out_bf.shape == (batch, layer_dims[-1])
            assert jnp.allclose(out_bf, ref_bf, atol=2e-3, rtol=2e-3), (
                f"bf16 mismatch vs bf16 reference (batch={batch}, act={activation})"
            )

    print("KERNEL_OK")
</pallas_src>

<mosaic_0001>
module attributes {stable_mosaic.version = 11 : i64} {
  func.func @_rvtdnn_kernel(%arg0: i32, %arg1: memref<6x128xf32, #tpu.memory_space<vmem>>, %arg2: memref<32x6xf32, #tpu.memory_space<vmem>>, %arg3: memref<32x1xf32, #tpu.memory_space<vmem>>, %arg4: memref<32x32xf32, #tpu.memory_space<vmem>>, %arg5: memref<32x1xf32, #tpu.memory_space<vmem>>, %arg6: memref<2x32xf32, #tpu.memory_space<vmem>>, %arg7: memref<2x1xf32, #tpu.memory_space<vmem>>, %arg8: memref<2x128xf32, #tpu.memory_space<vmem>>) attributes {dimension_semantics = [#tpu.dimension_semantics<parallel>], iteration_bounds = array<i64: 1>, scalar_prefetch = 0 : i64, scratch_operands = 0 : i64, tpu.core_type = #tpu.core_type<tc>, window_params = [{transform_indices = @transform_0, window_bounds = array<i64: 6, 128>}, {pipeline_mode = #tpu.pipeline_mode<synchronous>, transform_indices = @transform_1, window_bounds = array<i64: 32, 6>}, {pipeline_mode = #tpu.pipeline_mode<synchronous>, transform_indices = @transform_2, window_bounds = array<i64: 32, 1>}, {pipeline_mode = #tpu.pipeline_mode<synchronous>, transform_indices = @transform_3, window_bounds = array<i64: 32, 32>}, {pipeline_mode = #tpu.pipeline_mode<synchronous>, transform_indices = @transform_4, window_bounds = array<i64: 32, 1>}, {pipeline_mode = #tpu.pipeline_mode<synchronous>, transform_indices = @transform_5, window_bounds = array<i64: 2, 32>}, {pipeline_mode = #tpu.pipeline_mode<synchronous>, transform_indices = @transform_6, window_bounds = array<i64: 2, 1>}, {transform_indices = @transform_7, window_bounds = array<i64: 2, 128>}]} {
    %c0 = arith.constant 0 : index
    %c0_0 = arith.constant 0 : index
    %0 = vector.load %arg1[%c0, %c0_0] : memref<6x128xf32, #tpu.memory_space<vmem>>, vector<6x128xf32>
    %c0_1 = arith.constant 0 : index
    %c0_2 = arith.constant 0 : index
    %1 = vector.load %arg2[%c0_1, %c0_2] : memref<32x6xf32, #tpu.memory_space<vmem>>, vector<32x6xf32>
    %cst = arith.constant dense<0.000000e+00> : vector<32x128xf32>
    %2 = tpu.matmul %1, %0, %cst {dimension_numbers = #tpu.dot_dimension_numbers<[1], [0], [0], [1], [0, 0, 1, 1], [], []>} : vector<32x6xf32>, vector<6x128xf32>, vector<32x128xf32> -> vector<32x128xf32>
    %c0_3 = arith.constant 0 : index
    %c0_4 = arith.constant 0 : index
    %3 = vector.load %arg3[%c0_3, %c0_4] : memref<32x1xf32, #tpu.memory_space<vmem>>, vector<32x1xf32>
    %4 = vector.broadcast %3 : vector<32x1xf32> to vector<32x128xf32>
    %5 = arith.addf %2, %4 : vector<32x128xf32>
    %cst_5 = arith.constant 0.000000e+00 : f32
    %6 = vector.broadcast %cst_5 : f32 to vector<32x128xf32>
    %7 = arith.maximumf %5, %6 : vector<32x128xf32>
    %c0_6 = arith.constant 0 : index
    %c0_7 = arith.constant 0 : index
    %8 = vector.load %arg4[%c0_6, %c0_7] : memref<32x32xf32, #tpu.memory_space<vmem>>, vector<32x32xf32>
    %cst_8 = arith.constant dense<0.000000e+00> : vector<32x128xf32>
    %9 = tpu.matmul %8, %7, %cst_8 {dimension_numbers = #tpu.dot_dimension_numbers<[1], [0], [0], [1], [0, 0, 1, 1], [], []>} : vector<32x32xf32>, vector<32x128xf32>, vector<32x128xf32> -> vector<32x128xf32>
    %c0_9 = arith.constant 0 : index
    %c0_10 = arith.constant 0 : index
    %10 = vector.load %arg5[%c0_9, %c0_10] : memref<32x1xf32, #tpu.memory_space<vmem>>, vector<32x1xf32>
    %11 = vector.broadcast %10 : vector<32x1xf32> to vector<32x128xf32>
    %12 = arith.addf %9, %11 : vector<32x128xf32>
    %cst_11 = arith.constant 0.000000e+00 : f32
    %13 = vector.broadcast %cst_11 : f32 to vector<32x128xf32>
    %14 = arith.maximumf %12, %13 : vector<32x128xf32>
    %c0_12 = arith.constant 0 : index
    %c0_13 = arith.constant 0 : index
    %15 = vector.load %arg6[%c0_12, %c0_13] : memref<2x32xf32, #tpu.memory_space<vmem>>, vector<2x32xf32>
    %cst_14 = arith.constant dense<0.000000e+00> : vector<2x128xf32>
    %16 = tpu.matmul %15, %14, %cst_14 {dimension_numbers = #tpu.dot_dimension_numbers<[1], [0], [0], [1], [0, 0, 1, 1], [], []>} : vector<2x32xf32>, vector<32x128xf32>, vector<2x128xf32> -> vector<2x128xf32>
    %c0_15 = arith.constant 0 : index
    %c0_16 = arith.constant 0 : index
    %17 = vector.load %arg7[%c0_15, %c0_16] : memref<2x1xf32, #tpu.memory_space<vmem>>, vector<2x1xf32>
    %18 = vector.broadcast %17 : vector<2x1xf32> to vector<2x128xf32>
    %19 = arith.addf %16, %18 : vector<2x128xf32>
    %c0_17 = arith.constant 0 : index
    %c0_18 = arith.constant 0 : index
    %20 = vector.load %arg8[%c0_17, %c0_18] : memref<2x128xf32, #tpu.memory_space<vmem>>, vector<2x128xf32>
    tpu.vector_store %arg8[%c0_17, %c0_18], %19 {strides = array<i32>} : memref<2x128xf32, #tpu.memory_space<vmem>>, vector<2x128xf32>,
    return
  }
  func.func @transform_0(%arg0: i32) -> (i32, i32) {
    %c0_i32 = arith.constant 0 : i32
    %c0_i32_0 = arith.constant 0 : i32
    return %c0_i32, %arg0 : i32, i32
  }
  func.func @transform_1(%arg0: i32) -> (i32, i32) {
    %c0_i32 = arith.constant 0 : i32
    %c0_i32_0 = arith.constant 0 : i32
    %c0_i32_1 = arith.constant 0 : i32
    return %c0_i32, %c0_i32_0 : i32, i32
  }
  func.func @transform_2(%arg0: i32) -> (i32, i32) {
    %c0_i32 = arith.constant 0 : i32
    %c0_i32_0 = arith.constant 0 : i32
    %c0_i32_1 = arith.constant 0 : i32
    return %c0_i32, %c0_i32_0 : i32, i32
  }
  func.func @transform_3(%arg0: i32) -> (i32, i32) {
    %c0_i32 = arith.constant 0 : i32
    %c0_i32_0 = arith.constant 0 : i32
    %c0_i32_1 = arith.constant 0 : i32
    return %c0_i32, %c0_i32_0 : i32, i32
  }
  func.func @transform_4(%arg0: i32) -> (i32, i32) {
    %c0_i32 = arith.constant 0 : i32
    %c0_i32_0 = arith.constant 0 : i32
    %c0_i32_1 = arith.constant 0 : i32
    return %c0_i32, %c0_i32_0 : i32, i32
  }
  func.func @transform_5(%arg0: i32) -> (i32, i32) {
    %c0_i32 = arith.constant 0 : i32
    %c0_i32_0 = arith.constant 0 : i32
    %c0_i32_1 = arith.constant 0 : i32
    return %c0_i32, %c0_i32_0 : i32, i32
  }
  func.func @transform_6(%arg0: i32) -> (i32, i32) {
    %c0_i32 = arith.constant 0 : i32
    %c0_i32_0 = arith.constant 0 : i32
    %c0_i32_1 = arith.constant 0 : i32
    return %c0_i32, %c0_i32_0 : i32, i32
  }
  func.func @transform_7(%arg0: i32) -> (i32, i32) {
    %c0_i32 = arith.constant 0 : i32
    %c0_i32_0 = arith.constant 0 : i32
    return %c0_i32, %arg0 : i32, i32
  }
}

</mosaic_0001>

<llo_original>
// kernel: tpu_custom_call.1
$region0: #{tpu_custom_call.1}
  #allocation0 [shape = 'u32[]', space=smem, size = 0x4, offset = 0x4, fixed_abs, tag = 'smem constant byte address 0x4 - core index']
  #allocation1 [shape = 'u32[144,128]{1,0:T(1,128)}', space=vmem, size = 0x12000, scoped, tag = 'internal scratch']
  %s0 = inlined_call_operand.vmem [shape: f32[6,128], index: 0, kind: input, shape index: {}]
  %s1 = inlined_call_operand.vmem [shape: f32[32,6], index: 1, kind: input, shape index: {}]
  %s2 = inlined_call_operand.vmem [shape: f32[32,1], index: 2, kind: input, shape index: {}]
  %s3 = inlined_call_operand.vmem [shape: f32[32,32], index: 3, kind: input, shape index: {}]
  %s4 = inlined_call_operand.vmem [shape: f32[32,1], index: 4, kind: input, shape index: {}]
  %s5 = inlined_call_operand.vmem [shape: f32[2,32], index: 5, kind: input, shape index: {}]
  %s6 = inlined_call_operand.vmem [shape: f32[2,1], index: 6, kind: input, shape index: {}]
  %s7 = inlined_call_operand.hbm [shape: f32[2,128], index: 7, kind: output, shape index: {}]
  %s8 = sld [smem:[#allocation0]]
  $region38: #{tpu_custom_call.1} parent=0
    _
  %s10 = ssub.s32 1, %s8
  %s11 = scalar_select 0, %s10, %s8
  $region1: #{tpu_custom_call.1} parent=0
    #allocation2 [shape = 'u8[1024]{0}', space=vmem, size = 0x400, scoped, tag = 'output window, operand 0, single buffered']
    #allocation3 [shape = 's32[1]{0}', space=sflag, size = 0x4, scoped, tag = 'scoped memory for tpu_custom_call.1']
    %12 = vsyncpa [#allocation3], 0
    // Predicated region
    $region2: #{tpu_custom_call.1} parent=1 // pred_check
      _
    $region3: #{tpu_custom_call.1} parent=1 // pred_check_branch
      %14 = sbr.rel (0) target = $region5
    $region4: #{tpu_custom_call.1} parent=1 // pred_region
      _
    $region5: #{tpu_custom_call.1} parent=1 // pred_fallthru
      _
    // Predicated region
    $region6: #{tpu_custom_call.1} parent=1 // pred_check
      _
    $region7: #{tpu_custom_call.1} parent=1 // pred_check_branch
      %16 = sbr.rel (0) target = $region9
    $region8: #{tpu_custom_call.1} parent=1 // pred_region
      _
    $region9: #{tpu_custom_call.1} parent=1 // pred_fallthru
      _
    // Predicated region
    $region10: #{tpu_custom_call.1} parent=1 // pred_check
      _
    $region11: #{tpu_custom_call.1} parent=1 // pred_check_branch
      %18 = sbr.rel (0) target = $region13
    $region12: #{tpu_custom_call.1} parent=1 // pred_region
      _
    $region13: #{tpu_custom_call.1} parent=1 // pred_fallthru
      _
    // Predicated region
    $region14: #{tpu_custom_call.1} parent=1 // pred_check
      _
    $region15: #{tpu_custom_call.1} parent=1 // pred_check_branch
      %20 = sbr.rel (0) target = $region17
    $region16: #{tpu_custom_call.1} parent=1 // pred_region
      _
    $region17: #{tpu_custom_call.1} parent=1 // pred_fallthru
      _
    // Predicated region
    $region18: #{tpu_custom_call.1} parent=1 // pred_check
      _
    $region19: #{tpu_custom_call.1} parent=1 // pred_check_branch
      %22 = sbr.rel (0) target = $region21
    $region20: #{tpu_custom_call.1} parent=1 // pred_region
      _
    $region21: #{tpu_custom_call.1} parent=1 // pred_fallthru
      _
    // Predicated region
    $region22: #{tpu_custom_call.1} parent=1 // pred_check
      _
    $region23: #{tpu_custom_call.1} parent=1 // pred_check_branch
      %24 = sbr.rel (0) target = $region25
    $region24: #{tpu_custom_call.1} parent=1 // pred_region
      _
    $region25: #{tpu_custom_call.1} parent=1 // pred_fallthru
      _
    // Predicated region
    $region26: #{tpu_custom_call.1} parent=1 // pred_check
      _
    $region27: #{tpu_custom_call.1} parent=1 // pred_check_branch
      %26 = sbr.rel (0) target = $region29
    $region28: #{tpu_custom_call.1} parent=1 // pred_region
      _
    $region29: #{tpu_custom_call.1} parent=1 // pred_fallthru
      _
    %v27 = vld [vmem:[%s0] sm:$0x3f]
    %v28 = vld [vmem:[%s1] sm:$0xff]
    %v29 = vld [vmem:[%s1 + $0x8] sm:$0xff]
    %v30 = vld [vmem:[%s1 + $0x10] sm:$0xff]
    %v31 = vld [vmem:[%s1 + $0x18] sm:$0xff]
    %v32 = vld [vmem:[%s2] sm:$0xff]
    %v33 = vld [vmem:[%s2 + $0x8] sm:$0xff]
    %v34 = vld [vmem:[%s2 + $0x10] sm:$0xff]
    %v35 = vld [vmem:[%s2 + $0x18] sm:$0xff]
    %37 = vset.pattern.permute.xlu0 0
    %38 = vperm.xlu0 %37, %v32
    %v39 = vpop.permute.xlu0 %38
    %42 = vset.pattern.permute.xlu0 0
    %43 = vperm.xlu0 %42, %v33
    %v44 = vpop.permute.xlu0 %43
    %47 = vset.pattern.permute.xlu0 0
    %48 = vperm.xlu0 %47, %v34
    %v49 = vpop.permute.xlu0 %48
    %52 = vset.pattern.permute.xlu0 0
    %53 = vperm.xlu0 %52, %v35
    %v54 = vpop.permute.xlu0 %53
    %vm56 = vcmask 48128
    %v58 = vsel %vm56, %v28, 0
    %v61 = vsel %vm56, %v29, 0
    %v64 = vsel %vm56, %v30, 0
    %v67 = vsel %vm56, %v31, 0
    %vm69 = vcmask 1045504
    %v71 = vsel %vm69, %v27, 0
    %73 = vmatprep.subr.mxu0 0.0
    %74 = vmatpush1.msra.mxu0 %v71
    %75 = vmatprep.subr.mxu0 0.0
    %76 = vmatpush1.msra.mxu0 0.0
    %77 = vmatprep.subr.mxu0 0.0
    %78 = vmatpush1.msra.mxu0 0.0
    %79 = vmatprep.subr.mxu0 0.0
    %80 = vmatpush1.msra.mxu0 0.0
    %81 = vmatprep.subr.mxu0 0.0
    %82 = vmatpush1.msra.mxu0 0.0
    %83 = vmatprep.subr.mxu0 0.0
    %84 = vmatpush1.msra.mxu0 0.0
    %85 = vmatprep.subr.mxu0 0.0
    %86 = vmatpush1.msra.mxu0 0.0
    %87 = vmatprep.subr.mxu0 0.0
    %88 = vmatpush1.msra.mxu0 0.0
    %89 = vmatprep.subr.mxu0 0.0
    %90 = vmatpush1.msra.mxu0 0.0
    %91 = vmatprep.subr.mxu0 0.0
    %92 = vmatpush1.msra.mxu0 0.0
    %93 = vmatprep.subr.mxu0 0.0
    %94 = vmatpush1.msra.mxu0 0.0
    %95 = vmatprep.subr.mxu0 0.0
    %96 = vmatpush1.msra.mxu0 0.0
    %97 = vmatprep.subr.mxu0 0.0
    %98 = vmatpush1.msra.mxu0 0.0
    %99 = vmatprep.subr.mxu0 0.0
    %100 = vmatpush1.msra.mxu0 0.0
    %101 = vmatprep.subr.mxu0 0.0
    %102 = vmatpush1.msra.mxu0 0.0
    %103 = vmatprep.subr.mxu0 0.0
    %104 = vmatpush1.msra.mxu0 0.0
    %105 = vmatprep.subr.mxu0 0.0
    %106 = vmatpush1.msra.mxu0 0.0
    %107 = vmatprep.subr.mxu0 0.0
    %108 = vmatpush1.msra.mxu0 0.0
    %109 = vmatprep.subr.mxu0 0.0
    %110 = vmatpush1.msra.mxu0 0.0
    %111 = vmatprep.subr.mxu0 0.0
    %112 = vmatpush1.msra.mxu0 0.0
    %113 = vmatprep.subr.mxu0 0.0
    %114 = vmatpush1.msra.mxu0 0.0
    %115 = vmatprep.subr.mxu0 0.0
    %116 = vmatpush1.msra.mxu0 0.0
    %117 = vmatprep.subr.mxu0 0.0
    %118 = vmatpush1.msra.mxu0 0.0
    %119 = vmatprep.subr.mxu0 0.0
    %120 = vmatpush1.msra.mxu0 0.0
    %121 = vmatprep.subr.mxu0 0.0
    %122 = vmatpush1.msra.mxu0 0.0
    %123 = vmatprep.subr.mxu0 0.0
    %124 = vmatpush1.msra.mxu0 0.0
    %125 = vmatprep.subr.mxu0 0.0
    %126 = vmatpush1.msra.mxu0 0.0
    %127 = vmatprep.subr.mxu0 0.0
    %128 = vmatpush1.msra.mxu0 0.0
    %129 = vmatprep.subr.mxu0 0.0
    %130 = vmatpush1.msra.mxu0 0.0
    %131 = vmatprep.subr.mxu0 0.0
    %132 = vmatpush1.msra.mxu0 0.0
    %133 = vmatprep.subr.mxu0 0.0
    %134 = vmatpush1.msra.mxu0 0.0
    %135 = vmatprep.subr.mxu0 0.0
    %136 = vmatpush1.msra.mxu0 0.0
    %137 = vmatprep.mubr.f32.mxu0 0.0
    %138 = vmatmul.mubr.f32.gmra.mrb[0].mxu0 %v58
    %v139 = vpop.f32.mrb[0].mxu0
    %v140 = vadd.f32 %v39, %v139
    %v141 = vpop.f32.mrb[0].mxu0
    %142 = vmatprep.mubr.f32.mxu0 0.0
    %143 = vmatmul.mubr.f32.gmra.mrb[0].mxu0 %v61
    %v144 = vpop.f32.mrb[0].mxu0
    %v145 = vadd.f32 %v44, %v144
    %v146 = vpop.f32.mrb[0].mxu0
    %147 = vmatprep.mubr.f32.mxu0 0.0
    %148 = vmatmul.mubr.f32.gmra.mrb[0].mxu0 %v64
    %v149 = vpop.f32.mrb[0].mxu0
    %v150 = vadd.f32 %v49, %v149
    %v151 = vpop.f32.mrb[0].mxu0
    %152 = vmatprep.mubr.f32.mxu0 0.0
    %153 = vmatmul.mubr.f32.gmra.mrb[0].mxu0 %v67
    %v154 = vpop.f32.mrb[0].mxu0
    %v155 = vadd.f32 %v54, %v154
    %v156 = vpop.f32.mrb[0].mxu0
    %157 = vdwg.mxu0
    %v158 = vmax.f32 %v140, 0.0
    %v159 = vmax.f32 %v145, 0.0
    %v160 = vmax.f32 %v150, 0.0
    %v161 = vmax.f32 %v155, 0.0
    %v162 = vld [vmem:[%s3] sm:$0xff]
    %v163 = vld [vmem:[%s3 + $0x8] sm:$0xff]
    %v164 = vld [vmem:[%s3 + $0x10] sm:$0xff]
    %v165 = vld [vmem:[%s3 + $0x18] sm:$0xff]
    %v166 = vld [vmem:[%s4] sm:$0xff]
    %v167 = vld [vmem:[%s4 + $0x8] sm:$0xff]
    %v168 = vld [vmem:[%s4 + $0x10] sm:$0xff]
    %v169 = vld [vmem:[%s4 + $0x18] sm:$0xff]
    %171 = vset.pattern.permute.xlu0 0
    %172 = vperm.xlu0 %171, %v166
    %v173 = vpop.permute.xlu0 %172
    %176 = vset.pattern.permute.xlu0 0
    %177 = vperm.xlu0 %176, %v167
    %v178 = vpop.permute.xlu0 %177
    %181 = vset.pattern.permute.xlu0 0
    %182 = vperm.xlu0 %181, %v168
    %v183 = vpop.permute.xlu0 %182
    %186 = vset.pattern.permute.xlu0 0
    %187 = vperm.xlu0 %186, %v169
    %v188 = vpop.permute.xlu0 %187
    %vm190 = vcmask 261120
    %v192 = vsel %vm190, %v162, 0
    %v195 = vsel %vm190, %v163, 0
    %v198 = vsel %vm190, %v164, 0
    %v201 = vsel %vm190, %v165, 0
    %203 = vmatprep.subr.mxu0 0.0
    %204 = vmatpush1.msra.mxu0 %v158
    %205 = vmatprep.subr.mxu0 0.0
    %206 = vmatpush1.msra.mxu0 %v159
    %207 = vmatprep.subr.mxu0 0.0
    %208 = vmatpush1.msra.mxu0 %v160
    %209 = vmatprep.subr.mxu0 0.0
    %210 = vmatpush1.msra.mxu0 %v161
    %211 = vmatprep.subr.mxu0 0.0
    %212 = vmatpush1.msra.mxu0 0.0
    %213 = vmatprep.subr.mxu0 0.0
    %214 = vmatpush1.msra.mxu0 0.0
    %215 = vmatprep.subr.mxu0 0.0
    %216 = vmatpush1.msra.mxu0 0.0
    %217 = vmatprep.subr.mxu0 0.0
    %218 = vmatpush1.msra.mxu0 0.0
    %219 = vmatprep.subr.mxu0 0.0
    %220 = vmatpush1.msra.mxu0 0.0
    %221 = vmatprep.subr.mxu0 0.0
    %222 = vmatpush1.msra.mxu0 0.0
    %223 = vmatprep.subr.mxu0 0.0
    %224 = vmatpush1.msra.mxu0 0.0
    %225 = vmatprep.subr.mxu0 0.0
    %226 = vmatpush1.msra.mxu0 0.0
    %227 = vmatprep.subr.mxu0 0.0
    %228 = vmatpush1.msra.mxu0 0.0
    %229 = vmatprep.subr.mxu0 0.0
    %230 = vmatpush1.msra.mxu0 0.0
    %231 = vmatprep.subr.mxu0 0.0
    %232 = vmatpush1.msra.mxu0 0.0
    %233 = vmatprep.subr.mxu0 0.0
    %234 = vmatpush1.msra.mxu0 0.0
    %235 = vmatprep.subr.mxu0 0.0
    %236 = vmatpush1.msra.mxu0 0.0
    %237 = vmatprep.subr.mxu0 0.0
    %238 = vmatpush1.msra.mxu0 0.0
    %239 = vmatprep.subr.mxu0 0.0
    %240 = vmatpush1.msra.mxu0 0.0
    %241 = vmatprep.subr.mxu0 0.0
    %242 = vmatpush1.msra.mxu0 0.0
    %243 = vmatprep.subr.mxu0 0.0
    %244 = vmatpush1.msra.mxu0 0.0
    %245 = vmatprep.subr.mxu0 0.0
    %246 = vmatpush1.msra.mxu0 0.0
    %247 = vmatprep.subr.mxu0 0.0
    %248 = vmatpush1.msra.mxu0 0.0
    %249 = vmatprep.subr.mxu0 0.0
    %250 = vmatpush1.msra.mxu0 0.0
    %251 = vmatprep.subr.mxu0 0.0
    %252 = vmatpush1.msra.mxu0 0.0
    %253 = vmatprep.subr.mxu0 0.0
    %254 = vmatpush1.msra.mxu0 0.0
    %255 = vmatprep.subr.mxu0 0.0
    %256 = vmatpush1.msra.mxu0 0.0
    %257 = vmatprep.subr.mxu0 0.0
    %258 = vmatpush1.msra.mxu0 0.0
    %259 = vmatprep.subr.mxu0 0.0
    %260 = vmatpush1.msra.mxu0 0.0
    %261 = vmatprep.subr.mxu0 0.0
    %262 = vmatpush1.msra.mxu0 0.0
    %263 = vmatprep.subr.mxu0 0.0
    %264 = vmatpush1.msra.mxu0 0.0
    %265 = vmatprep.subr.mxu0 0.0
    %266 = vmatpush1.msra.mxu0 0.0
    %267 = vmatprep.mubr.f32.mxu0 0.0
    %268 = vmatmul.mubr.f32.gmra.mrb[0].mxu0 %v192
    %v269 = vpop.f32.mrb[0].mxu0
    %v270 = vadd.f32 %v173, %v269
    %v271 = vpop.f32.mrb[0].mxu0
    %272 = vmatprep.mubr.f32.mxu0 0.0
    %273 = vmatmul.mubr.f32.gmra.mrb[0].mxu0 %v195
    %v274 = vpop.f32.mrb[0].mxu0
    %v275 = vadd.f32 %v178, %v274
    %v276 = vpop.f32.mrb[0].mxu0
    %277 = vmatprep.mubr.f32.mxu0 0.0
    %278 = vmatmul.mubr.f32.gmra.mrb[0].mxu0 %v198
    %v279 = vpop.f32.mrb[0].mxu0
    %v280 = vadd.f32 %v183, %v279
    %v281 = vpop.f32.mrb[0].mxu0
    %282 = vmatprep.mubr.f32.mxu0 0.0
    %283 = vmatmul.mubr.f32.gmra.mrb[0].mxu0 %v201
    %v284 = vpop.f32.mrb[0].mxu0
    %v285 = vadd.f32 %v188, %v284
    %v286 = vpop.f32.mrb[0].mxu0
    %287 = vdwg.mxu0
    %v288 = vmax.f32 %v270, 0.0
    %v289 = vmax.f32 %v275, 0.0
    %v290 = vmax.f32 %v280, 0.0
    %v291 = vmax.f32 %v285, 0.0
    %v292 = vld [vmem:[%s5] sm:$0x3]
    %v293 = vld [vmem:[%s6] sm:$0x3]
    %295 = vset.pattern.permute.xlu0 0
    %296 = vperm.xlu0 %295, %v293
    %v297 = vpop.permute.xlu0 %296
    %v300 = vsel %vm190, %v292, 0
    %302 = vmatprep.subr.mxu0 0.0
    %303 = vmatpush1.msra.mxu0 %v288
    %304 = vmatprep.subr.mxu0 0.0
    %305 = vmatpush1.msra.mxu0 %v289
    %306 = vmatprep.subr.mxu0 0.0
    %307 = vmatpush1.msra.mxu0 %v290
    %308 = vmatprep.subr.mxu0 0.0
    %309 = vmatpush1.msra.mxu0 %v291
    %310 = vmatprep.subr.mxu0 0.0
    %311 = vmatpush1.msra.mxu0 0.0
    %312 = vmatprep.subr.mxu0 0.0
    %313 = vmatpush1.msra.mxu0 0.0
    %314 = vmatprep.subr.mxu0 0.0
    %315 = vmatpush1.msra.mxu0 0.0
    %316 = vmatprep.subr.mxu0 0.0
    %317 = vmatpush1.msra.mxu0 0.0
    %318 = vmatprep.subr.mxu0 0.0
    %319 = vmatpush1.msra.mxu0 0.0
    %320 = vmatprep.subr.mxu0 0.0
    %321 = vmatpush1.msra.mxu0 0.0
    %322 = vmatprep.subr.mxu0 0.0
    %323 = vmatpush1.msra.mxu0 0.0
    %324 = vmatprep.subr.mxu0 0.0
    %325 = vmatpush1.msra.mxu0 0.0
    %326 = vmatprep.subr.mxu0 0.0
    %327 = vmatpush1.msra.mxu0 0.0
    %328 = vmatprep.subr.mxu0 0.0
    %329 = vmatpush1.msra.mxu0 0.0
    %330 = vmatprep.subr.mxu0 0.0
    %331 = vmatpush1.msra.mxu0 0.0
    %332 = vmatprep.subr.mxu0 0.0
    %333 = vmatpush1.msra.mxu0 0.0
    %334 = vmatprep.subr.mxu0 0.0
    %335 = vmatpush1.msra.mxu0 0.0
    %336 = vmatprep.subr.mxu0 0.0
    %337 = vmatpush1.msra.mxu0 0.0
    %338 = vmatprep.subr.mxu0 0.0
    %339 = vmatpush1.msra.mxu0 0.0
    %340 = vmatprep.subr.mxu0 0.0
    %341 = vmatpush1.msra.mxu0 0.0
    %342 = vmatprep.subr.mxu0 0.0
    %343 = vmatpush1.msra.mxu0 0.0
    %344 = vmatprep.subr.mxu0 0.0
    %345 = vmatpush1.msra.mxu0 0.0
    %346 = vmatprep.subr.mxu0 0.0
    %347 = vmatpush1.msra.mxu0 0.0
    %348 = vmatprep.subr.mxu0 0.0
    %349 = vmatpush1.msra.mxu0 0.0
    %350 = vmatprep.subr.mxu0 0.0
    %351 = vmatpush1.msra.mxu0 0.0
    %352 = vmatprep.subr.mxu0 0.0
    %353 = vmatpush1.msra.mxu0 0.0
    %354 = vmatprep.subr.mxu0 0.0
    %355 = vmatpush1.msra.mxu0 0.0
    %356 = vmatprep.subr.mxu0 0.0
    %357 = vmatpush1.msra.mxu0 0.0
    %358 = vmatprep.subr.mxu0 0.0
    %359 = vmatpush1.msra.mxu0 0.0
    %360 = vmatprep.subr.mxu0 0.0
    %361 = vmatpush1.msra.mxu0 0.0
    %362 = vmatprep.subr.mxu0 0.0
    %363 = vmatpush1.msra.mxu0 0.0
    %364 = vmatprep.subr.mxu0 0.0
    %365 = vmatpush1.msra.mxu0 0.0
    %366 = vmatprep.mubr.f32.mxu0 0.0
    %367 = vmatmul.mubr.f32.gmra.mrb[0].mxu0 %v300
    %v368 = vpop.f32.mrb[0].mxu0
    %v369 = vadd.f32 %v297, %v368
    %v370 = vpop.f32.mrb[0].mxu0
    %371 = vdwg.mxu0
    %372 = vst [vmem:[#allocation2] sm:$0x3] %v369
    // Predicated region
    $region30: #{tpu_custom_call.1} parent=1 // pred_check
      _
    $region31: #{tpu_custom_call.1} parent=1 // pred_check_branch
      %374 = sbr.rel (0) target = $region33
    $region32: #{tpu_custom_call.1} parent=1 // pred_region
      %s376 = ssub.s32 32, 32
      %377 = vsyncadd [#allocation3], %s376
      %s379 = sshll.u32 [#allocation2], 4
      %s380 = int_to_ptr.vmem [resolvable:$true] %s379
      %382 = dma.vmem_to_hbm [thread:$0]  %s380, 32, %s7, [#allocation3]
    $region33: #{tpu_custom_call.1} parent=1 // pred_fallthru
      _
    // Predicated region
    $region34: #{tpu_custom_call.1} parent=1 // pred_check
      _
    $region35: #{tpu_custom_call.1} parent=1 // pred_check_branch
      %384 = sbr.rel (0) target = $region37
    $region36: #{tpu_custom_call.1} parent=1 // pred_region
      %385 = dma.done [#allocation3], 32
    $region37: #{tpu_custom_call.1} parent=1 // pred_fallthru
      _
    %386 = vsyncpa [#allocation3], 1

</llo_original>
